<compile_context>
chip_gen: v6e
topology: v6e:2x2x1
jax: 0.10.0
libtpu: 0.0.40
codegen_flags: <defaults>
</compile_context>

<pallas_src>
import jax
import jax.numpy as jnp
from jax.experimental import pallas as pl
from jax.experimental.pallas import tpu as pltpu

HIDDEN = 50
H_PAD = 64      # hidden width padded to a sublane-friendly multiple of 8
OUT_PAD = 8     # final output row (1) padded to one f32 sublane tile


def _round_up(x, m):
    return (x + m - 1) // m * m


def _value_net_kernel(x_ref, w1_ref, b1_ref, w2_ref, b2_ref,
                      w3_ref, b3_ref, w4_ref, b4_ref, o_ref):
    # x_ref: [D_pad, TB]  (batch on lanes)
    x = x_ref[...]
    h1 = jnp.tanh(
        jnp.dot(w1_ref[...], x, preferred_element_type=jnp.float32) + b1_ref[...]
    )                                                            # [H_PAD, TB]
    h2 = jnp.tanh(
        jnp.dot(w2_ref[...], h1, preferred_element_type=jnp.float32) + b2_ref[...]
    )                                                            # [H_PAD, TB]
    h3 = jnp.tanh(
        jnp.dot(w3_ref[...], h2, preferred_element_type=jnp.float32) + b3_ref[...]
    )                                                            # [H_PAD, TB]
    out = jnp.dot(w4_ref[...], h3, preferred_element_type=jnp.float32) + b4_ref[...]
    o_ref[...] = out.astype(o_ref.dtype)                         # [OUT_PAD, TB] lane-dense


def value_network_forward(states, params, *, max_batch_tile=512):
    """states: [B, state_dim] f32.  params: PyTorch-layout weights/biases
    (w: [out, in], b: [out])."""
    B, D = states.shape
    D_pad = _round_up(max(D, 1), 8)
    TB = min(max_batch_tile, _round_up(B, 128))   # batch tile, multiple of 128
    B_pad = _round_up(B, TB)

    # Batch on the lane axis: [D_pad, B_pad], zero-padded.
    x_t = jnp.zeros((D_pad, B_pad), jnp.float32).at[:D, :B].set(states.T)

    def pad_w(w, rows, cols):
        buf = jnp.zeros((rows, cols), jnp.float32)
        return buf.at[: w.shape[0], : w.shape[1]].set(w)

    def pad_b(b, rows):
        buf = jnp.zeros((rows, 1), jnp.float32)
        return buf.at[: b.shape[0], 0].set(b)

    w1 = pad_w(params["w1"], H_PAD, D_pad)
    b1 = pad_b(params["b1"], H_PAD)
    w2 = pad_w(params["w2"], H_PAD, H_PAD)
    b2 = pad_b(params["b2"], H_PAD)
    w3 = pad_w(params["w3"], H_PAD, H_PAD)
    b3 = pad_b(params["b3"], H_PAD)
    w4 = pad_w(params["w4"], OUT_PAD, H_PAD)
    b4 = pad_b(params["b4"], OUT_PAD)

    grid = (B_pad // TB,)
    const = lambda i: (0, 0)  # weights/biases: same block every step (stay resident)

    in_specs = [
        pl.BlockSpec((D_pad, TB), lambda i: (0, i)),   # states tile (pipelined)
        pl.BlockSpec((H_PAD, D_pad), const),
        pl.BlockSpec((H_PAD, 1), const),
        pl.BlockSpec((H_PAD, H_PAD), const),
        pl.BlockSpec((H_PAD, 1), const),
        pl.BlockSpec((H_PAD, H_PAD), const),
        pl.BlockSpec((H_PAD, 1), const),
        pl.BlockSpec((OUT_PAD, H_PAD), const),
        pl.BlockSpec((OUT_PAD, 1), const),
    ]
    out_spec = pl.BlockSpec((OUT_PAD, TB), lambda i: (0, i))

    flops = 2 * B_pad * (D_pad * H_PAD + 2 * H_PAD * H_PAD + H_PAD * OUT_PAD)
    transcendentals = 3 * B_pad * H_PAD
    bytes_accessed = 4 * (
        D_pad * B_pad + OUT_PAD * B_pad
        + H_PAD * D_pad + 2 * H_PAD * H_PAD + OUT_PAD * H_PAD
        + 3 * H_PAD + OUT_PAD
    )

    out = pl.pallas_call(
        _value_net_kernel,
        out_shape=jax.ShapeDtypeStruct((OUT_PAD, B_pad), jnp.float32),
        grid=grid,
        in_specs=in_specs,
        out_specs=out_spec,
        compiler_params=pltpu.CompilerParams(
            dimension_semantics=("parallel",),       # megacore-shard batch on v7x
            vmem_limit_bytes=32 * 1024 * 1024,       # safe on v5e/v6e/v7x
        ),
        cost_estimate=pl.CostEstimate(
            flops=flops,
            transcendentals=transcendentals,
            bytes_accessed=bytes_accessed,
        ),
    )(x_t, w1, b1, w2, b2, w3, b3, w4, b4)

    # Row 0 holds the real output; padded batch columns are sliced away.
    return out[0, :B].reshape(B, 1)


def init_params(state_dim, key):
    """Deterministic synthetic init matching PyTorch nn.Linear shapes
    (w: [out, in], b: [out])."""
    ks = jax.random.split(key, 8)

    def uniform(k, shape, fan_in):
        bound = 1.0 / jnp.sqrt(jnp.float32(fan_in))
        return jax.random.uniform(k, shape, jnp.float32, -bound, bound)

    return {
        "w1": uniform(ks[0], (HIDDEN, state_dim), state_dim),
        "b1": uniform(ks[1], (HIDDEN,), state_dim),
        "w2": uniform(ks[2], (HIDDEN, HIDDEN), HIDDEN),
        "b2": uniform(ks[3], (HIDDEN,), HIDDEN),
        "w3": uniform(ks[4], (HIDDEN, HIDDEN), HIDDEN),
        "b3": uniform(ks[5], (HIDDEN,), HIDDEN),
        "w4": uniform(ks[6], (1, HIDDEN), HIDDEN),
        "b4": uniform(ks[7], (1,), HIDDEN),
    }


def reference_forward(states, p):
    h = jnp.tanh(states @ p["w1"].T + p["b1"])
    h = jnp.tanh(h @ p["w2"].T + p["b2"])
    h = jnp.tanh(h @ p["w3"].T + p["b3"])
    return h @ p["w4"].T + p["b4"]


if __name__ == "__main__":
    key = jax.random.PRNGKey(0)
    k_x, k_p = jax.random.split(key)

    batch = 2
    state_dim = 16
    states = jax.random.normal(k_x, (batch, state_dim), jnp.float32)
    params = init_params(state_dim, k_p)

    out = value_network_forward(states, params)
    out = jax.block_until_ready(out)

    ref = reference_forward(states, params)
    assert out.shape == (batch, 1)
    assert jnp.allclose(out, ref, atol=1e-4, rtol=1e-5), (out, ref)

    print("KERNEL_OK")
</pallas_src>

<mosaic_0001>
module attributes {stable_mosaic.version = 11 : i64} {
  func.func @_value_net_kernel(%arg0: i32, %arg1: memref<16x128xf32, #tpu.memory_space<vmem>>, %arg2: memref<64x16xf32, #tpu.memory_space<vmem>>, %arg3: memref<64x1xf32, #tpu.memory_space<vmem>>, %arg4: memref<64x64xf32, #tpu.memory_space<vmem>>, %arg5: memref<64x1xf32, #tpu.memory_space<vmem>>, %arg6: memref<64x64xf32, #tpu.memory_space<vmem>>, %arg7: memref<64x1xf32, #tpu.memory_space<vmem>>, %arg8: memref<8x64xf32, #tpu.memory_space<vmem>>, %arg9: memref<8x1xf32, #tpu.memory_space<vmem>>, %arg10: memref<8x128xf32, #tpu.memory_space<vmem>>) attributes {dimension_semantics = [#tpu.dimension_semantics<parallel>], iteration_bounds = array<i64: 1>, scalar_prefetch = 0 : i64, scratch_operands = 0 : i64, tpu.core_type = #tpu.core_type<tc>, window_params = [{transform_indices = @transform_0, window_bounds = array<i64: 16, 128>}, {pipeline_mode = #tpu.pipeline_mode<synchronous>, transform_indices = @transform_1, window_bounds = array<i64: 64, 16>}, {pipeline_mode = #tpu.pipeline_mode<synchronous>, transform_indices = @transform_2, window_bounds = array<i64: 64, 1>}, {pipeline_mode = #tpu.pipeline_mode<synchronous>, transform_indices = @transform_3, window_bounds = array<i64: 64, 64>}, {pipeline_mode = #tpu.pipeline_mode<synchronous>, transform_indices = @transform_4, window_bounds = array<i64: 64, 1>}, {pipeline_mode = #tpu.pipeline_mode<synchronous>, transform_indices = @transform_5, window_bounds = array<i64: 64, 64>}, {pipeline_mode = #tpu.pipeline_mode<synchronous>, transform_indices = @transform_6, window_bounds = array<i64: 64, 1>}, {pipeline_mode = #tpu.pipeline_mode<synchronous>, transform_indices = @transform_7, window_bounds = array<i64: 8, 64>}, {pipeline_mode = #tpu.pipeline_mode<synchronous>, transform_indices = @transform_8, window_bounds = array<i64: 8, 1>}, {transform_indices = @transform_9, window_bounds = array<i64: 8, 128>}]} {
    %c0 = arith.constant 0 : index
    %c0_0 = arith.constant 0 : index
    %0 = vector.load %arg1[%c0, %c0_0] : memref<16x128xf32, #tpu.memory_space<vmem>>, vector<16x128xf32>
    %c0_1 = arith.constant 0 : index
    %c0_2 = arith.constant 0 : index
    %1 = vector.load %arg2[%c0_1, %c0_2] : memref<64x16xf32, #tpu.memory_space<vmem>>, vector<64x16xf32>
    %cst = arith.constant dense<0.000000e+00> : vector<64x128xf32>
    %2 = tpu.matmul %1, %0, %cst {dimension_numbers = #tpu.dot_dimension_numbers<[1], [0], [0], [1], [0, 0, 1, 1], [], []>} : vector<64x16xf32>, vector<16x128xf32>, vector<64x128xf32> -> vector<64x128xf32>
    %c0_3 = arith.constant 0 : index
    %c0_4 = arith.constant 0 : index
    %3 = vector.load %arg3[%c0_3, %c0_4] : memref<64x1xf32, #tpu.memory_space<vmem>>, vector<64x1xf32>
    %4 = vector.broadcast %3 : vector<64x1xf32> to vector<64x128xf32>
    %5 = arith.addf %2, %4 : vector<64x128xf32>
    %6 = math.tanh %5 : vector<64x128xf32>
    %c0_5 = arith.constant 0 : index
    %c0_6 = arith.constant 0 : index
    %7 = vector.load %arg4[%c0_5, %c0_6] : memref<64x64xf32, #tpu.memory_space<vmem>>, vector<64x64xf32>
    %cst_7 = arith.constant dense<0.000000e+00> : vector<64x128xf32>
    %8 = tpu.matmul %7, %6, %cst_7 {dimension_numbers = #tpu.dot_dimension_numbers<[1], [0], [0], [1], [0, 0, 1, 1], [], []>} : vector<64x64xf32>, vector<64x128xf32>, vector<64x128xf32> -> vector<64x128xf32>
    %c0_8 = arith.constant 0 : index
    %c0_9 = arith.constant 0 : index
    %9 = vector.load %arg5[%c0_8, %c0_9] : memref<64x1xf32, #tpu.memory_space<vmem>>, vector<64x1xf32>
    %10 = vector.broadcast %9 : vector<64x1xf32> to vector<64x128xf32>
    %11 = arith.addf %8, %10 : vector<64x128xf32>
    %12 = math.tanh %11 : vector<64x128xf32>
    %c0_10 = arith.constant 0 : index
    %c0_11 = arith.constant 0 : index
    %13 = vector.load %arg6[%c0_10, %c0_11] : memref<64x64xf32, #tpu.memory_space<vmem>>, vector<64x64xf32>
    %cst_12 = arith.constant dense<0.000000e+00> : vector<64x128xf32>
    %14 = tpu.matmul %13, %12, %cst_12 {dimension_numbers = #tpu.dot_dimension_numbers<[1], [0], [0], [1], [0, 0, 1, 1], [], []>} : vector<64x64xf32>, vector<64x128xf32>, vector<64x128xf32> -> vector<64x128xf32>
    %c0_13 = arith.constant 0 : index
    %c0_14 = arith.constant 0 : index
    %15 = vector.load %arg7[%c0_13, %c0_14] : memref<64x1xf32, #tpu.memory_space<vmem>>, vector<64x1xf32>
    %16 = vector.broadcast %15 : vector<64x1xf32> to vector<64x128xf32>
    %17 = arith.addf %14, %16 : vector<64x128xf32>
    %18 = math.tanh %17 : vector<64x128xf32>
    %c0_15 = arith.constant 0 : index
    %c0_16 = arith.constant 0 : index
    %19 = vector.load %arg8[%c0_15, %c0_16] : memref<8x64xf32, #tpu.memory_space<vmem>>, vector<8x64xf32>
    %cst_17 = arith.constant dense<0.000000e+00> : vector<8x128xf32>
    %20 = tpu.matmul %19, %18, %cst_17 {dimension_numbers = #tpu.dot_dimension_numbers<[1], [0], [0], [1], [0, 0, 1, 1], [], []>} : vector<8x64xf32>, vector<64x128xf32>, vector<8x128xf32> -> vector<8x128xf32>
    %c0_18 = arith.constant 0 : index
    %c0_19 = arith.constant 0 : index
    %21 = vector.load %arg9[%c0_18, %c0_19] : memref<8x1xf32, #tpu.memory_space<vmem>>, vector<8x1xf32>
    %22 = vector.broadcast %21 : vector<8x1xf32> to vector<8x128xf32>
    %23 = arith.addf %20, %22 : vector<8x128xf32>
    %c0_20 = arith.constant 0 : index
    %c0_21 = arith.constant 0 : index
    %24 = vector.load %arg10[%c0_20, %c0_21] : memref<8x128xf32, #tpu.memory_space<vmem>>, vector<8x128xf32>
    tpu.vector_store %arg10[%c0_20, %c0_21], %23 {strides = array<i32>} : memref<8x128xf32, #tpu.memory_space<vmem>>, vector<8x128xf32>,
    return
  }
  func.func @transform_0(%arg0: i32) -> (i32, i32) {
    %c0_i32 = arith.constant 0 : i32
    %c0_i32_0 = arith.constant 0 : i32
    return %c0_i32, %arg0 : i32, i32
  }
  func.func @transform_1(%arg0: i32) -> (i32, i32) {
    %c0_i32 = arith.constant 0 : i32
    %c0_i32_0 = arith.constant 0 : i32
    %c0_i32_1 = arith.constant 0 : i32
    return %c0_i32, %c0_i32_0 : i32, i32
  }
  func.func @transform_2(%arg0: i32) -> (i32, i32) {
    %c0_i32 = arith.constant 0 : i32
    %c0_i32_0 = arith.constant 0 : i32
    %c0_i32_1 = arith.constant 0 : i32
    return %c0_i32, %c0_i32_0 : i32, i32
  }
  func.func @transform_3(%arg0: i32) -> (i32, i32) {
    %c0_i32 = arith.constant 0 : i32
    %c0_i32_0 = arith.constant 0 : i32
    %c0_i32_1 = arith.constant 0 : i32
    return %c0_i32, %c0_i32_0 : i32, i32
  }
  func.func @transform_4(%arg0: i32) -> (i32, i32) {
    %c0_i32 = arith.constant 0 : i32
    %c0_i32_0 = arith.constant 0 : i32
    %c0_i32_1 = arith.constant 0 : i32
    return %c0_i32, %c0_i32_0 : i32, i32
  }
  func.func @transform_5(%arg0: i32) -> (i32, i32) {
    %c0_i32 = arith.constant 0 : i32
    %c0_i32_0 = arith.constant 0 : i32
    %c0_i32_1 = arith.constant 0 : i32
    return %c0_i32, %c0_i32_0 : i32, i32
  }
  func.func @transform_6(%arg0: i32) -> (i32, i32) {
    %c0_i32 = arith.constant 0 : i32
    %c0_i32_0 = arith.constant 0 : i32
    %c0_i32_1 = arith.constant 0 : i32
    return %c0_i32, %c0_i32_0 : i32, i32
  }
  func.func @transform_7(%arg0: i32) -> (i32, i32) {
    %c0_i32 = arith.constant 0 : i32
    %c0_i32_0 = arith.constant 0 : i32
    %c0_i32_1 = arith.constant 0 : i32
    return %c0_i32, %c0_i32_0 : i32, i32
  }
  func.func @transform_8(%arg0: i32) -> (i32, i32) {
    %c0_i32 = arith.constant 0 : i32
    %c0_i32_0 = arith.constant 0 : i32
    %c0_i32_1 = arith.constant 0 : i32
    return %c0_i32, %c0_i32_0 : i32, i32
  }
  func.func @transform_9(%arg0: i32) -> (i32, i32) {
    %c0_i32 = arith.constant 0 : i32
    %c0_i32_0 = arith.constant 0 : i32
    return %c0_i32, %arg0 : i32, i32
  }
}

</mosaic_0001>

<llo_original>
// kernel: tpu_custom_call.1
$region0: #{tpu_custom_call.1}
  #allocation0 [shape = 'u32[]', space=smem, size = 0x4, offset = 0x4, fixed_abs, tag = 'smem constant byte address 0x4 - core index']
  #allocation1 [shape = 'u32[144,128]{1,0:T(1,128)}', space=vmem, size = 0x12000, scoped, tag = 'internal scratch']
  %s0 = inlined_call_operand.vmem [shape: f32[16,128], index: 0, kind: input, shape index: {}]
  %s1 = inlined_call_operand.vmem [shape: f32[64,16], index: 1, kind: input, shape index: {}]
  %s2 = inlined_call_operand.vmem [shape: f32[64,1], index: 2, kind: input, shape index: {}]
  %s3 = inlined_call_operand.vmem [shape: f32[64,64], index: 3, kind: input, shape index: {}]
  %s4 = inlined_call_operand.vmem [shape: f32[64,1], index: 4, kind: input, shape index: {}]
  %s5 = inlined_call_operand.vmem [shape: f32[64,64], index: 5, kind: input, shape index: {}]
  %s6 = inlined_call_operand.vmem [shape: f32[64,1], index: 6, kind: input, shape index: {}]
  %s7 = inlined_call_operand.vmem [shape: f32[8,64], index: 7, kind: input, shape index: {}]
  %s8 = inlined_call_operand.vmem [shape: f32[8,1], index: 8, kind: input, shape index: {}]
  %s9 = inlined_call_operand.hbm [shape: f32[8,128], index: 9, kind: output, shape index: {}]
  %s10 = sld [smem:[#allocation0]]
  $region46: #{tpu_custom_call.1} parent=0
    _
  %s12 = ssub.s32 1, %s10
  %s13 = scalar_select 0, %s12, %s10
  $region1: #{tpu_custom_call.1} parent=0
    #allocation2 [shape = 'u8[4096]{0}', space=vmem, size = 0x1000, scoped, tag = 'output window, operand 0, single buffered']
    #allocation3 [shape = 's32[1]{0}', space=sflag, size = 0x4, scoped, tag = 'scoped memory for tpu_custom_call.1']
    %14 = vsyncpa [#allocation3], 0
    // Predicated region
    $region2: #{tpu_custom_call.1} parent=1 // pred_check
      _
    $region3: #{tpu_custom_call.1} parent=1 // pred_check_branch
      %16 = sbr.rel (0) target = $region5
    $region4: #{tpu_custom_call.1} parent=1 // pred_region
      _
    $region5: #{tpu_custom_call.1} parent=1 // pred_fallthru
      _
    // Predicated region
    $region6: #{tpu_custom_call.1} parent=1 // pred_check
      _
    $region7: #{tpu_custom_call.1} parent=1 // pred_check_branch
      %18 = sbr.rel (0) target = $region9
    $region8: #{tpu_custom_call.1} parent=1 // pred_region
      _
    $region9: #{tpu_custom_call.1} parent=1 // pred_fallthru
      _
    // Predicated region
    $region10: #{tpu_custom_call.1} parent=1 // pred_check
      _
    $region11: #{tpu_custom_call.1} parent=1 // pred_check_branch
      %20 = sbr.rel (0) target = $region13
    $region12: #{tpu_custom_call.1} parent=1 // pred_region
      _
    $region13: #{tpu_custom_call.1} parent=1 // pred_fallthru
      _
    // Predicated region
    $region14: #{tpu_custom_call.1} parent=1 // pred_check
      _
    $region15: #{tpu_custom_call.1} parent=1 // pred_check_branch
      %22 = sbr.rel (0) target = $region17
    $region16: #{tpu_custom_call.1} parent=1 // pred_region
      _
    $region17: #{tpu_custom_call.1} parent=1 // pred_fallthru
      _
    // Predicated region
    $region18: #{tpu_custom_call.1} parent=1 // pred_check
      _
    $region19: #{tpu_custom_call.1} parent=1 // pred_check_branch
      %24 = sbr.rel (0) target = $region21
    $region20: #{tpu_custom_call.1} parent=1 // pred_region
      _
    $region21: #{tpu_custom_call.1} parent=1 // pred_fallthru
      _
    // Predicated region
    $region22: #{tpu_custom_call.1} parent=1 // pred_check
      _
    $region23: #{tpu_custom_call.1} parent=1 // pred_check_branch
      %26 = sbr.rel (0) target = $region25
    $region24: #{tpu_custom_call.1} parent=1 // pred_region
      _
    $region25: #{tpu_custom_call.1} parent=1 // pred_fallthru
      _
    // Predicated region
    $region26: #{tpu_custom_call.1} parent=1 // pred_check
      _
    $region27: #{tpu_custom_call.1} parent=1 // pred_check_branch
      %28 = sbr.rel (0) target = $region29
    $region28: #{tpu_custom_call.1} parent=1 // pred_region
      _
    $region29: #{tpu_custom_call.1} parent=1 // pred_fallthru
      _
    // Predicated region
    $region30: #{tpu_custom_call.1} parent=1 // pred_check
      _
    $region31: #{tpu_custom_call.1} parent=1 // pred_check_branch
      %30 = sbr.rel (0) target = $region33
    $region32: #{tpu_custom_call.1} parent=1 // pred_region
      _
    $region33: #{tpu_custom_call.1} parent=1 // pred_fallthru
      _
    // Predicated region
    $region34: #{tpu_custom_call.1} parent=1 // pred_check
      _
    $region35: #{tpu_custom_call.1} parent=1 // pred_check_branch
      %32 = sbr.rel (0) target = $region37
    $region36: #{tpu_custom_call.1} parent=1 // pred_region
      _
    $region37: #{tpu_custom_call.1} parent=1 // pred_fallthru
      _
    %v33 = vld [vmem:[%s0] sm:$0xff]
    %v34 = vld [vmem:[%s0 + $0x8] sm:$0xff]
    %v35 = vld [vmem:[%s1] sm:$0xff]
    %v36 = vld [vmem:[%s1 + $0x8] sm:$0xff]
    %v37 = vld [vmem:[%s1 + $0x10] sm:$0xff]
    %v38 = vld [vmem:[%s1 + $0x18] sm:$0xff]
    %v39 = vld [vmem:[%s1 + $0x20] sm:$0xff]
    %v40 = vld [vmem:[%s1 + $0x28] sm:$0xff]
    %v41 = vld [vmem:[%s1 + $0x30] sm:$0xff]
    %v42 = vld [vmem:[%s1 + $0x38] sm:$0xff]
    %v43 = vld [vmem:[%s2] sm:$0xff]
    %v44 = vld [vmem:[%s2 + $0x8] sm:$0xff]
    %v45 = vld [vmem:[%s2 + $0x10] sm:$0xff]
    %v46 = vld [vmem:[%s2 + $0x18] sm:$0xff]
    %v47 = vld [vmem:[%s2 + $0x20] sm:$0xff]
    %v48 = vld [vmem:[%s2 + $0x28] sm:$0xff]
    %v49 = vld [vmem:[%s2 + $0x30] sm:$0xff]
    %v50 = vld [vmem:[%s2 + $0x38] sm:$0xff]
    %52 = vset.pattern.permute.xlu0 0
    %53 = vperm.xlu0 %52, %v43
    %v54 = vpop.permute.xlu0 %53
    %57 = vset.pattern.permute.xlu0 0
    %58 = vperm.xlu0 %57, %v44
    %v59 = vpop.permute.xlu0 %58
    %62 = vset.pattern.permute.xlu0 0
    %63 = vperm.xlu0 %62, %v45
    %v64 = vpop.permute.xlu0 %63
    %67 = vset.pattern.permute.xlu0 0
    %68 = vperm.xlu0 %67, %v46
    %v69 = vpop.permute.xlu0 %68
    %72 = vset.pattern.permute.xlu0 0
    %73 = vperm.xlu0 %72, %v47
    %v74 = vpop.permute.xlu0 %73
    %77 = vset.pattern.permute.xlu0 0
    %78 = vperm.xlu0 %77, %v48
    %v79 = vpop.permute.xlu0 %78
    %82 = vset.pattern.permute.xlu0 0
    %83 = vperm.xlu0 %82, %v49
    %v84 = vpop.permute.xlu0 %83
    %87 = vset.pattern.permute.xlu0 0
    %88 = vperm.xlu0 %87, %v50
    %v89 = vpop.permute.xlu0 %88
    %vm91 = vcmask 130048
    %v93 = vsel %vm91, %v35, 0
    %v96 = vsel %vm91, %v36, 0
    %v99 = vsel %vm91, %v37, 0
    %v102 = vsel %vm91, %v38, 0
    %v105 = vsel %vm91, %v39, 0
    %v108 = vsel %vm91, %v40, 0
    %v111 = vsel %vm91, %v41, 0
    %v114 = vsel %vm91, %v42, 0
    %116 = vmatprep.subr.mxu0 0.0
    %117 = vmatpush1.msra.mxu0 0.0
    %118 = vmatprep.subr.mxu0 0.0
    %119 = vmatpush1.msra.mxu0 0.0
    %120 = vmatprep.subr.mxu0 0.0
    %121 = vmatpush1.msra.mxu0 0.0
    %122 = vmatprep.subr.mxu0 0.0
    %123 = vmatpush1.msra.mxu0 0.0
    %124 = vmatprep.subr.mxu0 0.0
    %125 = vmatpush1.msra.mxu0 0.0
    %126 = vmatprep.subr.mxu0 0.0
    %127 = vmatpush1.msra.mxu0 0.0
    %128 = vmatprep.subr.mxu0 0.0
    %129 = vmatpush1.msra.mxu0 0.0
    %130 = vmatprep.subr.mxu0 0.0
    %131 = vmatpush1.msra.mxu0 0.0
    %132 = vmatprep.subr.mxu0 0.0
    %133 = vmatpush1.msra.mxu0 0.0
    %134 = vmatprep.subr.mxu0 0.0
    %135 = vmatpush1.msra.mxu0 0.0
    %136 = vmatprep.subr.mxu0 0.0
    %137 = vmatpush1.msra.mxu0 0.0
    %138 = vmatprep.subr.mxu0 0.0
    %139 = vmatpush1.msra.mxu0 0.0
    %140 = vmatprep.subr.mxu0 0.0
    %141 = vmatpush1.msra.mxu0 0.0
    %142 = vmatprep.subr.mxu0 0.0
    %143 = vmatpush1.msra.mxu0 0.0
    %144 = vmatprep.subr.mxu0 0.0
    %145 = vmatpush1.msra.mxu0 %v34
    %146 = vmatprep.subr.mxu0 0.0
    %147 = vmatpush1.msra.mxu0 %v33
    %148 = vmatprep.subr.mxu0 0.0
    %149 = vmatpush2.msra.mxu0 0.0
    %150 = vmatprep.subr.mxu0 0.0
    %151 = vmatpush2.msra.mxu0 0.0
    %152 = vmatprep.subr.mxu0 0.0
    %153 = vmatpush2.msra.mxu0 0.0
    %154 = vmatprep.subr.mxu0 0.0
    %155 = vmatpush2.msra.mxu0 0.0
    %156 = vmatprep.subr.mxu0 0.0
    %157 = vmatpush2.msra.mxu0 0.0
    %158 = vmatprep.subr.mxu0 0.0
    %159 = vmatpush2.msra.mxu0 0.0
    %160 = vmatprep.subr.mxu0 0.0
    %161 = vmatpush2.msra.mxu0 0.0
    %162 = vmatprep.subr.mxu0 0.0
    %163 = vmatpush2.msra.mxu0 0.0
    %164 = vmatprep.subr.mxu0 0.0
    %165 = vmatpush2.msra.mxu0 0.0
    %166 = vmatprep.subr.mxu0 0.0
    %167 = vmatpush2.msra.mxu0 0.0
    %168 = vmatprep.subr.mxu0 0.0
    %169 = vmatpush2.msra.mxu0 0.0
    %170 = vmatprep.subr.mxu0 0.0
    %171 = vmatpush2.msra.mxu0 0.0
    %172 = vmatprep.subr.mxu0 0.0
    %173 = vmatpush2.msra.mxu0 0.0
    %174 = vmatprep.subr.mxu0 0.0
    %175 = vmatpush2.msra.mxu0 0.0
    %176 = vmatprep.subr.mxu0 0.0
    %177 = vmatpush2.msra.mxu0 0.0
    %178 = vmatprep.subr.mxu0 0.0
    %179 = vmatpush2.msra.mxu0 0.0
    %180 = vmatprep.mubr.f32.mxu0 0.0
    %181 = vmatmul.mubr.f32.gmra.mxu0 %v93
    %v182 = vpop.f32.mrf.mxu0
    %v183 = vadd.f32 %v54, %v182
    %v184 = vpop.f32.mrf.mxu0
    %185 = vmatprep.mubr.f32.mxu0 0.0
    %186 = vmatmul.mubr.f32.gmra.mxu0 %v96
    %v187 = vpop.f32.mrf.mxu0
    %v188 = vadd.f32 %v59, %v187
    %v189 = vpop.f32.mrf.mxu0
    %190 = vmatprep.mubr.f32.mxu0 0.0
    %191 = vmatmul.mubr.f32.gmra.mxu0 %v99
    %v192 = vpop.f32.mrf.mxu0
    %v193 = vadd.f32 %v64, %v192
    %v194 = vpop.f32.mrf.mxu0
    %195 = vmatprep.mubr.f32.mxu0 0.0
    %196 = vmatmul.mubr.f32.gmra.mxu0 %v102
    %v197 = vpop.f32.mrf.mxu0
    %v198 = vadd.f32 %v69, %v197
    %v199 = vpop.f32.mrf.mxu0
    %200 = vmatprep.mubr.f32.mxu0 0.0
    %201 = vmatmul.mubr.f32.gmra.mxu0 %v105
    %v202 = vpop.f32.mrf.mxu0
    %v203 = vadd.f32 %v74, %v202
    %v204 = vpop.f32.mrf.mxu0
    %205 = vmatprep.mubr.f32.mxu0 0.0
    %206 = vmatmul.mubr.f32.gmra.mxu0 %v108
    %v207 = vpop.f32.mrf.mxu0
    %v208 = vadd.f32 %v79, %v207
    %v209 = vpop.f32.mrf.mxu0
    %210 = vmatprep.mubr.f32.mxu0 0.0
    %211 = vmatmul.mubr.f32.gmra.mxu0 %v111
    %v212 = vpop.f32.mrf.mxu0
    %v213 = vadd.f32 %v84, %v212
    %v214 = vpop.f32.mrf.mxu0
    %215 = vmatprep.mubr.f32.mxu0 0.0
    %216 = vmatmul.mubr.f32.gmra.mxu0 %v114
    %v217 = vpop.f32.mrf.mxu0
    %v218 = vadd.f32 %v89, %v217
    %v219 = vpop.f32.mrf.mxu0
    %220 = vdwg.mxu0
    %v221 = vtanh.pop %v183
    %v222 = vtanh.pop %v188
    %v223 = vtanh.pop %v193
    %v224 = vtanh.pop %v198
    %v225 = vtanh.pop %v203
    %v226 = vtanh.pop %v208
    %v227 = vtanh.pop %v213
    %v228 = vtanh.pop %v218
    %v229 = vld [vmem:[%s3] sm:$0xff]
    %v230 = vld [vmem:[%s3 + $0x8] sm:$0xff]
    %v231 = vld [vmem:[%s3 + $0x10] sm:$0xff]
    %v232 = vld [vmem:[%s3 + $0x18] sm:$0xff]
    %v233 = vld [vmem:[%s3 + $0x20] sm:$0xff]
    %v234 = vld [vmem:[%s3 + $0x28] sm:$0xff]
    %v235 = vld [vmem:[%s3 + $0x30] sm:$0xff]
    %v236 = vld [vmem:[%s3 + $0x38] sm:$0xff]
    %v237 = vld [vmem:[%s4] sm:$0xff]
    %v238 = vld [vmem:[%s4 + $0x8] sm:$0xff]
    %v239 = vld [vmem:[%s4 + $0x10] sm:$0xff]
    %v240 = vld [vmem:[%s4 + $0x18] sm:$0xff]
    %v241 = vld [vmem:[%s4 + $0x20] sm:$0xff]
    %v242 = vld [vmem:[%s4 + $0x28] sm:$0xff]
    %v243 = vld [vmem:[%s4 + $0x30] sm:$0xff]
    %v244 = vld [vmem:[%s4 + $0x38] sm:$0xff]
    %246 = vset.pattern.permute.xlu0 0
    %247 = vperm.xlu0 %246, %v237
    %v248 = vpop.permute.xlu0 %247
    %251 = vset.pattern.permute.xlu0 0
    %252 = vperm.xlu0 %251, %v238
    %v253 = vpop.permute.xlu0 %252
    %256 = vset.pattern.permute.xlu0 0
    %257 = vperm.xlu0 %256, %v239
    %v258 = vpop.permute.xlu0 %257
    %261 = vset.pattern.permute.xlu0 0
    %262 = vperm.xlu0 %261, %v240
    %v263 = vpop.permute.xlu0 %262
    %266 = vset.pattern.permute.xlu0 0
    %267 = vperm.xlu0 %266, %v241
    %v268 = vpop.permute.xlu0 %267
    %271 = vset.pattern.permute.xlu0 0
    %272 = vperm.xlu0 %271, %v242
    %v273 = vpop.permute.xlu0 %272
    %276 = vset.pattern.permute.xlu0 0
    %277 = vperm.xlu0 %276, %v243
    %v278 = vpop.permute.xlu0 %277
    %281 = vset.pattern.permute.xlu0 0
    %282 = vperm.xlu0 %281, %v244
    %v283 = vpop.permute.xlu0 %282
    %vm285 = vcmask 523264
    %v287 = vsel %vm285, %v229, 0
    %v290 = vsel %vm285, %v230, 0
    %v293 = vsel %vm285, %v231, 0
    %v296 = vsel %vm285, %v232, 0
    %v299 = vsel %vm285, %v233, 0
    %v302 = vsel %vm285, %v234, 0
    %v305 = vsel %vm285, %v235, 0
    %v308 = vsel %vm285, %v236, 0
    %310 = vmatprep.subr.mxu0 0.0
    %311 = vmatpush1.msra.mxu0 0.0
    %312 = vmatprep.subr.mxu0 0.0
    %313 = vmatpush1.msra.mxu0 0.0
    %314 = vmatprep.subr.mxu0 0.0
    %315 = vmatpush1.msra.mxu0 0.0
    %316 = vmatprep.subr.mxu0 0.0
    %317 = vmatpush1.msra.mxu0 0.0
    %318 = vmatprep.subr.mxu0 0.0
    %319 = vmatpush1.msra.mxu0 0.0
    %320 = vmatprep.subr.mxu0 0.0
    %321 = vmatpush1.msra.mxu0 0.0
    %322 = vmatprep.subr.mxu0 0.0
    %323 = vmatpush1.msra.mxu0 0.0
    %324 = vmatprep.subr.mxu0 0.0
    %325 = vmatpush1.msra.mxu0 0.0
    %326 = vmatprep.subr.mxu0 0.0
    %327 = vmatpush1.msra.mxu0 %v228
    %328 = vmatprep.subr.mxu0 0.0
    %329 = vmatpush1.msra.mxu0 %v227
    %330 = vmatprep.subr.mxu0 0.0
    %331 = vmatpush1.msra.mxu0 %v226
    %332 = vmatprep.subr.mxu0 0.0
    %333 = vmatpush1.msra.mxu0 %v225
    %334 = vmatprep.subr.mxu0 0.0
    %335 = vmatpush1.msra.mxu0 %v224
    %336 = vmatprep.subr.mxu0 0.0
    %337 = vmatpush1.msra.mxu0 %v223
    %338 = vmatprep.subr.mxu0 0.0
    %339 = vmatpush1.msra.mxu0 %v222
    %340 = vmatprep.subr.mxu0 0.0
    %341 = vmatpush1.msra.mxu0 %v221
    %342 = vmatprep.subr.mxu0 0.0
    %343 = vmatpush2.msra.mxu0 0.0
    %344 = vmatprep.subr.mxu0 0.0
    %345 = vmatpush2.msra.mxu0 0.0
    %346 = vmatprep.subr.mxu0 0.0
    %347 = vmatpush2.msra.mxu0 0.0
    %348 = vmatprep.subr.mxu0 0.0
    %349 = vmatpush2.msra.mxu0 0.0
    %350 = vmatprep.subr.mxu0 0.0
    %351 = vmatpush2.msra.mxu0 0.0
    %352 = vmatprep.subr.mxu0 0.0
    %353 = vmatpush2.msra.mxu0 0.0
    %354 = vmatprep.subr.mxu0 0.0
    %355 = vmatpush2.msra.mxu0 0.0
    %356 = vmatprep.subr.mxu0 0.0
    %357 = vmatpush2.msra.mxu0 0.0
    %358 = vmatprep.subr.mxu0 0.0
    %359 = vmatpush2.msra.mxu0 0.0
    %360 = vmatprep.subr.mxu0 0.0
    %361 = vmatpush2.msra.mxu0 0.0
    %362 = vmatprep.subr.mxu0 0.0
    %363 = vmatpush2.msra.mxu0 0.0
    %364 = vmatprep.subr.mxu0 0.0
    %365 = vmatpush2.msra.mxu0 0.0
    %366 = vmatprep.subr.mxu0 0.0
    %367 = vmatpush2.msra.mxu0 0.0
    %368 = vmatprep.subr.mxu0 0.0
    %369 = vmatpush2.msra.mxu0 0.0
    %370 = vmatprep.subr.mxu0 0.0
    %371 = vmatpush2.msra.mxu0 0.0
    %372 = vmatprep.subr.mxu0 0.0
    %373 = vmatpush2.msra.mxu0 0.0
    %374 = vmatprep.mubr.f32.mxu0 0.0
    %375 = vmatmul.mubr.f32.gmra.mxu0 %v287
    %v376 = vpop.f32.mrf.mxu0
    %v377 = vadd.f32 %v248, %v376
    %v378 = vpop.f32.mrf.mxu0
    %379 = vmatprep.mubr.f32.mxu0 0.0
    %380 = vmatmul.mubr.f32.gmra.mxu0 %v290
    %v381 = vpop.f32.mrf.mxu0
    %v382 = vadd.f32 %v253, %v381
    %v383 = vpop.f32.mrf.mxu0
    %384 = vmatprep.mubr.f32.mxu0 0.0
    %385 = vmatmul.mubr.f32.gmra.mxu0 %v293
    %v386 = vpop.f32.mrf.mxu0
    %v387 = vadd.f32 %v258, %v386
    %v388 = vpop.f32.mrf.mxu0
    %389 = vmatprep.mubr.f32.mxu0 0.0
    %390 = vmatmul.mubr.f32.gmra.mxu0 %v296
    %v391 = vpop.f32.mrf.mxu0
    %v392 = vadd.f32 %v263, %v391
    %v393 = vpop.f32.mrf.mxu0
    %394 = vmatprep.mubr.f32.mxu0 0.0
    %395 = vmatmul.mubr.f32.gmra.mxu0 %v299
    %v396 = vpop.f32.mrf.mxu0
    %v397 = vadd.f32 %v268, %v396
    %v398 = vpop.f32.mrf.mxu0
    %399 = vmatprep.mubr.f32.mxu0 0.0
    %400 = vmatmul.mubr.f32.gmra.mxu0 %v302
    %v401 = vpop.f32.mrf.mxu0
    %v402 = vadd.f32 %v273, %v401
    %v403 = vpop.f32.mrf.mxu0
    %404 = vmatprep.mubr.f32.mxu0 0.0
    %405 = vmatmul.mubr.f32.gmra.mxu0 %v305
    %v406 = vpop.f32.mrf.mxu0
    %v407 = vadd.f32 %v278, %v406
    %v408 = vpop.f32.mrf.mxu0
    %409 = vmatprep.mubr.f32.mxu0 0.0
    %410 = vmatmul.mubr.f32.gmra.mxu0 %v308
    %v411 = vpop.f32.mrf.mxu0
    %v412 = vadd.f32 %v283, %v411
    %v413 = vpop.f32.mrf.mxu0
    %414 = vdwg.mxu0
    %v415 = vtanh.pop %v377
    %v416 = vtanh.pop %v382
    %v417 = vtanh.pop %v387
    %v418 = vtanh.pop %v392
    %v419 = vtanh.pop %v397
    %v420 = vtanh.pop %v402
    %v421 = vtanh.pop %v407
    %v422 = vtanh.pop %v412
    %v423 = vld [vmem:[%s5] sm:$0xff]
    %v424 = vld [vmem:[%s5 + $0x8] sm:$0xff]
    %v425 = vld [vmem:[%s5 + $0x10] sm:$0xff]
    %v426 = vld [vmem:[%s5 + $0x18] sm:$0xff]
    %v427 = vld [vmem:[%s5 + $0x20] sm:$0xff]
    %v428 = vld [vmem:[%s5 + $0x28] sm:$0xff]
    %v429 = vld [vmem:[%s5 + $0x30] sm:$0xff]
    %v430 = vld [vmem:[%s5 + $0x38] sm:$0xff]
    %v431 = vld [vmem:[%s6] sm:$0xff]
    %v432 = vld [vmem:[%s6 + $0x8] sm:$0xff]
    %v433 = vld [vmem:[%s6 + $0x10] sm:$0xff]
    %v434 = vld [vmem:[%s6 + $0x18] sm:$0xff]
    %v435 = vld [vmem:[%s6 + $0x20] sm:$0xff]
    %v436 = vld [vmem:[%s6 + $0x28] sm:$0xff]
    %v437 = vld [vmem:[%s6 + $0x30] sm:$0xff]
    %v438 = vld [vmem:[%s6 + $0x38] sm:$0xff]
    %440 = vset.pattern.permute.xlu0 0
    %441 = vperm.xlu0 %440, %v431
    %v442 = vpop.permute.xlu0 %441
    %445 = vset.pattern.permute.xlu0 0
    %446 = vperm.xlu0 %445, %v432
    %v447 = vpop.permute.xlu0 %446
    %450 = vset.pattern.permute.xlu0 0
    %451 = vperm.xlu0 %450, %v433
    %v452 = vpop.permute.xlu0 %451
    %455 = vset.pattern.permute.xlu0 0
    %456 = vperm.xlu0 %455, %v434
    %v457 = vpop.permute.xlu0 %456
    %460 = vset.pattern.permute.xlu0 0
    %461 = vperm.xlu0 %460, %v435
    %v462 = vpop.permute.xlu0 %461
    %465 = vset.pattern.permute.xlu0 0
    %466 = vperm.xlu0 %465, %v436
    %v467 = vpop.permute.xlu0 %466
    %470 = vset.pattern.permute.xlu0 0
    %471 = vperm.xlu0 %470, %v437
    %v472 = vpop.permute.xlu0 %471
    %475 = vset.pattern.permute.xlu0 0
    %476 = vperm.xlu0 %475, %v438
    %v477 = vpop.permute.xlu0 %476
    %v480 = vsel %vm285, %v423, 0
    %v483 = vsel %vm285, %v424, 0
    %v486 = vsel %vm285, %v425, 0
    %v489 = vsel %vm285, %v426, 0
    %v492 = vsel %vm285, %v427, 0
    %v495 = vsel %vm285, %v428, 0
    %v498 = vsel %vm285, %v429, 0
    %v501 = vsel %vm285, %v430, 0
    %503 = vmatprep.subr.mxu0 0.0
    %504 = vmatpush1.msra.mxu0 0.0
    %505 = vmatprep.subr.mxu0 0.0
    %506 = vmatpush1.msra.mxu0 0.0
    %507 = vmatprep.subr.mxu0 0.0
    %508 = vmatpush1.msra.mxu0 0.0
    %509 = vmatprep.subr.mxu0 0.0
    %510 = vmatpush1.msra.mxu0 0.0
    %511 = vmatprep.subr.mxu0 0.0
    %512 = vmatpush1.msra.mxu0 0.0
    %513 = vmatprep.subr.mxu0 0.0
    %514 = vmatpush1.msra.mxu0 0.0
    %515 = vmatprep.subr.mxu0 0.0
    %516 = vmatpush1.msra.mxu0 0.0
    %517 = vmatprep.subr.mxu0 0.0
    %518 = vmatpush1.msra.mxu0 0.0
    %519 = vmatprep.subr.mxu0 0.0
    %520 = vmatpush1.msra.mxu0 %v422
    %521 = vmatprep.subr.mxu0 0.0
    %522 = vmatpush1.msra.mxu0 %v421
    %523 = vmatprep.subr.mxu0 0.0
    %524 = vmatpush1.msra.mxu0 %v420
    %525 = vmatprep.subr.mxu0 0.0
    %526 = vmatpush1.msra.mxu0 %v419
    %527 = vmatprep.subr.mxu0 0.0
    %528 = vmatpush1.msra.mxu0 %v418
    %529 = vmatprep.subr.mxu0 0.0
    %530 = vmatpush1.msra.mxu0 %v417
    %531 = vmatprep.subr.mxu0 0.0
    %532 = vmatpush1.msra.mxu0 %v416
    %533 = vmatprep.subr.mxu0 0.0
    %534 = vmatpush1.msra.mxu0 %v415
    %535 = vmatprep.subr.mxu0 0.0
    %536 = vmatpush2.msra.mxu0 0.0
    %537 = vmatprep.subr.mxu0 0.0
    %538 = vmatpush2.msra.mxu0 0.0
    %539 = vmatprep.subr.mxu0 0.0
    %540 = vmatpush2.msra.mxu0 0.0
    %541 = vmatprep.subr.mxu0 0.0
    %542 = vmatpush2.msra.mxu0 0.0
    %543 = vmatprep.subr.mxu0 0.0
    %544 = vmatpush2.msra.mxu0 0.0
    %545 = vmatprep.subr.mxu0 0.0
    %546 = vmatpush2.msra.mxu0 0.0
    %547 = vmatprep.subr.mxu0 0.0
    %548 = vmatpush2.msra.mxu0 0.0
    %549 = vmatprep.subr.mxu0 0.0
    %550 = vmatpush2.msra.mxu0 0.0
    %551 = vmatprep.subr.mxu0 0.0
    %552 = vmatpush2.msra.mxu0 0.0
    %553 = vmatprep.subr.mxu0 0.0
    %554 = vmatpush2.msra.mxu0 0.0
    %555 = vmatprep.subr.mxu0 0.0
    %556 = vmatpush2.msra.mxu0 0.0
    %557 = vmatprep.subr.mxu0 0.0
    %558 = vmatpush2.msra.mxu0 0.0
    %559 = vmatprep.subr.mxu0 0.0
    %560 = vmatpush2.msra.mxu0 0.0
    %561 = vmatprep.subr.mxu0 0.0
    %562 = vmatpush2.msra.mxu0 0.0
    %563 = vmatprep.subr.mxu0 0.0
    %564 = vmatpush2.msra.mxu0 0.0
    %565 = vmatprep.subr.mxu0 0.0
    %566 = vmatpush2.msra.mxu0 0.0
    %567 = vmatprep.mubr.f32.mxu0 0.0
    %568 = vmatmul.mubr.f32.gmra.mxu0 %v480
    %v569 = vpop.f32.mrf.mxu0
    %v570 = vadd.f32 %v442, %v569
    %v571 = vpop.f32.mrf.mxu0
    %572 = vmatprep.mubr.f32.mxu0 0.0
    %573 = vmatmul.mubr.f32.gmra.mxu0 %v483
    %v574 = vpop.f32.mrf.mxu0
    %v575 = vadd.f32 %v447, %v574
    %v576 = vpop.f32.mrf.mxu0
    %577 = vmatprep.mubr.f32.mxu0 0.0
    %578 = vmatmul.mubr.f32.gmra.mxu0 %v486
    %v579 = vpop.f32.mrf.mxu0
    %v580 = vadd.f32 %v452, %v579
    %v581 = vpop.f32.mrf.mxu0
    %582 = vmatprep.mubr.f32.mxu0 0.0
    %583 = vmatmul.mubr.f32.gmra.mxu0 %v489
    %v584 = vpop.f32.mrf.mxu0
    %v585 = vadd.f32 %v457, %v584
    %v586 = vpop.f32.mrf.mxu0
    %587 = vmatprep.mubr.f32.mxu0 0.0
    %588 = vmatmul.mubr.f32.gmra.mxu0 %v492
    %v589 = vpop.f32.mrf.mxu0
    %v590 = vadd.f32 %v462, %v589
    %v591 = vpop.f32.mrf.mxu0
    %592 = vmatprep.mubr.f32.mxu0 0.0
    %593 = vmatmul.mubr.f32.gmra.mxu0 %v495
    %v594 = vpop.f32.mrf.mxu0
    %v595 = vadd.f32 %v467, %v594
    %v596 = vpop.f32.mrf.mxu0
    %597 = vmatprep.mubr.f32.mxu0 0.0
    %598 = vmatmul.mubr.f32.gmra.mxu0 %v498
    %v599 = vpop.f32.mrf.mxu0
    %v600 = vadd.f32 %v472, %v599
    %v601 = vpop.f32.mrf.mxu0
    %602 = vmatprep.mubr.f32.mxu0 0.0
    %603 = vmatmul.mubr.f32.gmra.mxu0 %v501
    %v604 = vpop.f32.mrf.mxu0
    %v605 = vadd.f32 %v477, %v604
    %v606 = vpop.f32.mrf.mxu0
    %607 = vdwg.mxu0
    %v608 = vtanh.pop %v570
    %v609 = vtanh.pop %v575
    %v610 = vtanh.pop %v580
    %v611 = vtanh.pop %v585
    %v612 = vtanh.pop %v590
    %v613 = vtanh.pop %v595
    %v614 = vtanh.pop %v600
    %v615 = vtanh.pop %v605
    %v616 = vld [vmem:[%s7] sm:$0xff]
    %v617 = vld [vmem:[%s8] sm:$0xff]
    %619 = vset.pattern.permute.xlu0 0
    %620 = vperm.xlu0 %619, %v617
    %v621 = vpop.permute.xlu0 %620
    %v624 = vsel %vm285, %v616, 0
    %626 = vmatprep.subr.mxu0 0.0
    %627 = vmatpush1.msra.mxu0 0.0
    %628 = vmatprep.subr.mxu0 0.0
    %629 = vmatpush1.msra.mxu0 0.0
    %630 = vmatprep.subr.mxu0 0.0
    %631 = vmatpush1.msra.mxu0 0.0
    %632 = vmatprep.subr.mxu0 0.0
    %633 = vmatpush1.msra.mxu0 0.0
    %634 = vmatprep.subr.mxu0 0.0
    %635 = vmatpush1.msra.mxu0 0.0
    %636 = vmatprep.subr.mxu0 0.0
    %637 = vmatpush1.msra.mxu0 0.0
    %638 = vmatprep.subr.mxu0 0.0
    %639 = vmatpush1.msra.mxu0 0.0
    %640 = vmatprep.subr.mxu0 0.0
    %641 = vmatpush1.msra.mxu0 0.0
    %642 = vmatprep.subr.mxu0 0.0
    %643 = vmatpush1.msra.mxu0 %v615
    %644 = vmatprep.subr.mxu0 0.0
    %645 = vmatpush1.msra.mxu0 %v614
    %646 = vmatprep.subr.mxu0 0.0
    %647 = vmatpush1.msra.mxu0 %v613
    %648 = vmatprep.subr.mxu0 0.0
    %649 = vmatpush1.msra.mxu0 %v612
    %650 = vmatprep.subr.mxu0 0.0
    %651 = vmatpush1.msra.mxu0 %v611
    %652 = vmatprep.subr.mxu0 0.0
    %653 = vmatpush1.msra.mxu0 %v610
    %654 = vmatprep.subr.mxu0 0.0
    %655 = vmatpush1.msra.mxu0 %v609
    %656 = vmatprep.subr.mxu0 0.0
    %657 = vmatpush1.msra.mxu0 %v608
    %658 = vmatprep.subr.mxu0 0.0
    %659 = vmatpush2.msra.mxu0 0.0
    %660 = vmatprep.subr.mxu0 0.0
    %661 = vmatpush2.msra.mxu0 0.0
    %662 = vmatprep.subr.mxu0 0.0
    %663 = vmatpush2.msra.mxu0 0.0
    %664 = vmatprep.subr.mxu0 0.0
    %665 = vmatpush2.msra.mxu0 0.0
    %666 = vmatprep.subr.mxu0 0.0
    %667 = vmatpush2.msra.mxu0 0.0
    %668 = vmatprep.subr.mxu0 0.0
    %669 = vmatpush2.msra.mxu0 0.0
    %670 = vmatprep.subr.mxu0 0.0
    %671 = vmatpush2.msra.mxu0 0.0
    %672 = vmatprep.subr.mxu0 0.0
    %673 = vmatpush2.msra.mxu0 0.0
    %674 = vmatprep.subr.mxu0 0.0
    %675 = vmatpush2.msra.mxu0 0.0
    %676 = vmatprep.subr.mxu0 0.0
    %677 = vmatpush2.msra.mxu0 0.0
    %678 = vmatprep.subr.mxu0 0.0
    %679 = vmatpush2.msra.mxu0 0.0
    %680 = vmatprep.subr.mxu0 0.0
    %681 = vmatpush2.msra.mxu0 0.0
    %682 = vmatprep.subr.mxu0 0.0
    %683 = vmatpush2.msra.mxu0 0.0
    %684 = vmatprep.subr.mxu0 0.0
    %685 = vmatpush2.msra.mxu0 0.0
    %686 = vmatprep.subr.mxu0 0.0
    %687 = vmatpush2.msra.mxu0 0.0
    %688 = vmatprep.subr.mxu0 0.0
    %689 = vmatpush2.msra.mxu0 0.0
    %690 = vmatprep.mubr.f32.mxu0 0.0
    %691 = vmatmul.mubr.f32.gmra.mxu0 %v624
    %v692 = vpop.f32.mrf.mxu0
    %v693 = vadd.f32 %v621, %v692
    %v694 = vpop.f32.mrf.mxu0
    %695 = vdwg.mxu0
    %696 = vst [vmem:[#allocation2] sm:$0xff] %v693
    // Predicated region
    $region38: #{tpu_custom_call.1} parent=1 // pred_check
      _
    $region39: #{tpu_custom_call.1} parent=1 // pred_check_branch
      %698 = sbr.rel (0) target = $region41
    $region40: #{tpu_custom_call.1} parent=1 // pred_region
      %s700 = ssub.s32 128, 128
      %701 = vsyncadd [#allocation3], %s700
      %s703 = sshll.u32 [#allocation2], 4
      %s704 = int_to_ptr.vmem [resolvable:$true] %s703
      %706 = dma.vmem_to_hbm [thread:$0]  %s704, 128, %s9, [#allocation3]
    $region41: #{tpu_custom_call.1} parent=1 // pred_fallthru
      _
    // Predicated region
    $region42: #{tpu_custom_call.1} parent=1 // pred_check
      _
    $region43: #{tpu_custom_call.1} parent=1 // pred_check_branch
      %708 = sbr.rel (0) target = $region45
    $region44: #{tpu_custom_call.1} parent=1 // pred_region
      %709 = dma.done [#allocation3], 128
    $region45: #{tpu_custom_call.1} parent=1 // pred_fallthru
      _
    %710 = vsyncpa [#allocation3], 1

</llo_original>
